<compile_context>
chip_gen: v7x
topology: tpu7x:2x2x1
jax: 0.10.0
libtpu: 0.0.40
codegen_flags: <defaults>
</compile_context>

<pallas_src>
import functools

import jax
import jax.numpy as jnp
from jax.experimental import pallas as pl
from jax.experimental.pallas import tpu as pltpu

_TAP_ROWS = 8  # sublane-aligned rows reserved per 3x3 tap in the im2col buffer


def _silu(x):
    return x * jax.nn.sigmoid(x)


def _gelu(x):
    # tanh-approx GELU (== torch.nn.GELU(approximate='tanh')).  Switch to the
    # erf form if bit-matching torch.nn.GELU() (exact) is required.
    return jax.nn.gelu(x, approximate=True)


# -----------------------------------------------------------------------------
# Fused kernel: preprocess + im2col + (yolo & rtdetr heads).  One grid step
# processes B_TILE images fused on the lane axis (L = B_TILE * H * W).
# -----------------------------------------------------------------------------
def _pipeline_kernel(x_ref, border_ref, pw_ref, pb_ref, w1_ref, b1_ref,
                     w2_ref, b2_ref, yolo_ref, det_ref, im2col_ref,
                     *, W, co_y):
    # x_ref     : (1, cin_raw, L)
    # border_ref: (8, L)  rows 0..3 = [r>=1, r<H-1, c>=1, c<W-1], rows 4..7 = 1
    # pw_ref    : (8, cin_raw)   pb_ref : (8, 1)      (rows 3..7 are zero)
    # w1_ref    : (2*ch, 72)     b1_ref : (2*ch, 1)   [yolo ; rtdetr] fused
    # w2_ref    : (co_y+co_d, 2*ch)  block-diagonal   b2_ref : (co_y+co_d, 1)
    # yolo_ref  : (1, co_y, L)   det_ref: (1, co_d, L)
    # im2col_ref: (72, L) VMEM scratch
    L = x_ref.shape[-1]
    x = x_ref[0]                                            # (cin_raw, L)

    # ---- preprocess: 1x1 conv + bias + clamp (lane-dense, rows padded to 8) --
    rgb = jnp.dot(pw_ref[...], x, preferred_element_type=jnp.float32)
    rgb = jnp.clip(rgb + pb_ref[...], 0.0, 1.0)             # (8, L)

    # border-validity rows (each (1, L)); products of <= 2 per tap
    row_up = border_ref[0:1, :]      # valid when di == -1
    row_down = border_ref[1:2, :]    # valid when di == +1
    col_left = border_ref[2:3, :]    # valid when dj == -1
    col_right = border_ref[3:4, :]   # valid when dj == +1

    # ---- im2col: 9 masked lane-rolls -> (72, L), 8-row aligned blocks --------
    for k in range(9):
        di, dj = k // 3 - 1, k % 3 - 1                      # tap offsets in [-1, 1]
        off = di * W + dj                                   # flat lane offset
        tap = rgb if off == 0 else pltpu.roll(rgb, shift=(-off) % L, axis=1)
        m = None
        if di == -1:
            m = row_up
        elif di == 1:
            m = row_down
        if dj == -1:
            m = col_left if m is None else m * col_left
        elif dj == 1:
            m = col_right if m is None else m * col_right
        if m is not None:                                   # center tap: no mask
            tap = tap * m
        im2col_ref[_TAP_ROWS * k:_TAP_ROWS * (k + 1), :] = tap

    # ---- both heads' 3x3 stage as ONE (2*ch, 72) @ (72, L) MXU matmul --------
    h = jnp.dot(w1_ref[...], im2col_ref[...],
                preferred_element_type=jnp.float32) + b1_ref[...]
    ch = h.shape[0] // 2
    h_act = jnp.concatenate([_silu(h[:ch]), _gelu(h[ch:])], axis=0)  # (2*ch, L)

    # ---- fused block-diagonal 1x1 projections; split rows into the heads -----
    out = jnp.dot(w2_ref[...], h_act,
                  preferred_element_type=jnp.float32) + b2_ref[...]
    yolo_ref[0] = out[:co_y]
    det_ref[0] = out[co_y:]


# -----------------------------------------------------------------------------
# Wrapper-side weight / mask preparation (mirrors loading real torch weights).
# -----------------------------------------------------------------------------
def _prep_weights(params):
    c_rgb = params["pre_w"].shape[1]
    assert c_rgb <= _TAP_ROWS
    pad = _TAP_ROWS - c_rgb

    pw = jnp.pad(params["pre_w"].T, ((0, pad), (0, 0)))               # (8, cin)
    pb = jnp.pad(params["pre_b"].reshape(-1, 1), ((0, pad), (0, 0)))  # (8, 1)

    def tap_matrix(w1):                                  # (9, c_rgb, ch) -> (ch, 72)
        w = jnp.pad(w1, ((0, 0), (0, pad), (0, 0)))      # (9, 8, ch), zero taps
        return w.reshape(9 * _TAP_ROWS, -1).T

    w1c = jnp.concatenate([tap_matrix(params["y_w1"]),
                           tap_matrix(params["d_w1"])], axis=0)       # (2*ch, 72)
    b1c = jnp.concatenate([params["y_b1"].reshape(-1, 1),
                           params["d_b1"].reshape(-1, 1)], axis=0)    # (2*ch, 1)

    ch, co_y = params["y_w2"].shape
    co_d = params["d_w2"].shape[1]
    # Fused block-diagonal second-stage projection: one MXU matmul for 2 heads.
    w2bd = jnp.zeros((co_y + co_d, 2 * ch), jnp.float32)
    w2bd = w2bd.at[:co_y, :ch].set(params["y_w2"].T)
    w2bd = w2bd.at[co_y:, ch:].set(params["d_w2"].T)
    b2c = jnp.concatenate([params["y_b2"].reshape(-1, 1),
                           params["d_b2"].reshape(-1, 1)], axis=0)    # (co_y+co_d, 1)
    return pw, pb, w1c, b1c, w2bd, b2c


def _border_masks(H, W, b_tile):
    """(8, b_tile*H*W) 0/1 rows [r>=1, r<H-1, c>=1, c<W-1, 1, 1, 1, 1],
    replicated per fused image so circular lane-rolls never leak across images."""
    r = jnp.broadcast_to(jnp.arange(H)[:, None], (H, W)).reshape(1, H * W)
    c = jnp.broadcast_to(jnp.arange(W)[None, :], (H, W)).reshape(1, H * W)
    rows = jnp.concatenate([r >= 1, r < H - 1, c >= 1, c < W - 1,
                            jnp.ones((4, H * W), dtype=bool)], axis=0)
    return jnp.tile(rows.astype(jnp.float32), (1, b_tile))


def _choose_batch_tile(n, hw, target_lanes=2048, min_grid=2):
    """Largest divisor of n with b*hw <= target_lanes lanes per grid step,
    keeping >= min_grid steps when possible so both v7x TensorCores get work."""
    best = 1
    for b in range(1, n + 1):
        if n % b:
            continue
        if b * hw > target_lanes:
            break
        if b > 1 and n // b < min_grid:
            continue
        best = b
    return best


# -----------------------------------------------------------------------------
# RawPipeline forward: x (NCHW raw) -> (yolo_out, rtdetr_out), both NCHW.
# -----------------------------------------------------------------------------
@jax.jit
def raw_pipeline_forward(x_nchw, params):
    N, cin, H, W = x_nchw.shape
    HW = H * W
    ch = params["y_w1"].shape[2]
    co_y = params["y_w2"].shape[1]
    co_d = params["d_w2"].shape[1]
    assert ch % 8 == 0 and co_y % 8 == 0 and co_d % 8 == 0
    assert HW % 128 == 0

    b_tile = _choose_batch_tile(N, HW)
    G = N // b_tile
    L = b_tile * HW

    pw, pb, w1c, b1c, w2bd, b2c = _prep_weights(params)
    border = _border_masks(H, W, b_tile)                   # (8, L)
    # batch fused into the lane axis: (G, cin, b_tile*HW); layout plumbing only.
    x3 = x_nchw.reshape(G, b_tile, cin, HW).transpose(0, 2, 1, 3).reshape(G, cin, L)

    kernel = functools.partial(_pipeline_kernel, W=W, co_y=co_y)
    cost = pl.CostEstimate(
        flops=2 * N * HW * (_TAP_ROWS * cin + 2 * ch * 9 * _TAP_ROWS
                            + (co_y + co_d) * 2 * ch),
        transcendentals=2 * N * HW * ch,
        bytes_accessed=4 * (x3.size + border.size + pw.size + pb.size
                            + w1c.size + b1c.size + w2bd.size + b2c.size
                            + N * HW * (co_y + co_d)))

    yolo_flat, det_flat = pl.pallas_call(
        kernel,
        out_shape=(jax.ShapeDtypeStruct((G, co_y, L), jnp.float32),
                   jax.ShapeDtypeStruct((G, co_d, L), jnp.float32)),
        grid_spec=pltpu.PrefetchScalarGridSpec(
            num_scalar_prefetch=0,
            grid=(G,),
            in_specs=[
                pl.BlockSpec((1, cin, L), lambda g: (g, 0, 0)),
                pl.BlockSpec(border.shape, lambda g: (0, 0)),
                pl.BlockSpec(pw.shape, lambda g: (0, 0)),
                pl.BlockSpec(pb.shape, lambda g: (0, 0)),
                pl.BlockSpec(w1c.shape, lambda g: (0, 0)),
                pl.BlockSpec(b1c.shape, lambda g: (0, 0)),
                pl.BlockSpec(w2bd.shape, lambda g: (0, 0)),
                pl.BlockSpec(b2c.shape, lambda g: (0, 0)),
            ],
            out_specs=[
                pl.BlockSpec((1, co_y, L), lambda g: (g, 0, 0)),
                pl.BlockSpec((1, co_d, L), lambda g: (g, 0, 0)),
            ],
            scratch_shapes=[pltpu.VMEM((9 * _TAP_ROWS, L), jnp.float32)],
        ),
        compiler_params=pltpu.CompilerParams(
            dimension_semantics=("parallel",)),
        cost_estimate=cost,
    )(x3, border, pw, pb, w1c, b1c, w2bd, b2c)

    def unfuse(o, co):
        return (o.reshape(G, co, b_tile, HW).transpose(0, 2, 1, 3)
                 .reshape(N, co, H, W))

    return unfuse(yolo_flat, co_y), unfuse(det_flat, co_d)


# -----------------------------------------------------------------------------
# Plain-JAX (non-Pallas) reference of the same synthetic modules, for checking.
# -----------------------------------------------------------------------------
def raw_pipeline_reference(x_nchw, params):
    hp = jax.lax.Precision.HIGHEST
    x = jnp.transpose(x_nchw, (0, 2, 3, 1))                       # NHWC
    rgb = jnp.einsum("nhwc,cd->nhwd", x, params["pre_w"], precision=hp)
    rgb = jnp.clip(rgb + params["pre_b"][0], 0.0, 1.0)
    H, W = rgb.shape[1], rgb.shape[2]
    xp = jnp.pad(rgb, ((0, 0), (1, 1), (1, 1), (0, 0)))

    def head(w1, b1, w2, b2, act):
        acc = jnp.zeros(rgb.shape[:3] + (w1.shape[2],), jnp.float32)
        for k in range(9):
            di, dj = k // 3, k % 3
            patch = xp[:, di:di + H, dj:dj + W, :]
            acc = acc + jnp.einsum("nhwc,co->nhwo", patch, w1[k], precision=hp)
        h = act(acc + b1[0])
        out = jnp.einsum("nhwc,co->nhwo", h, w2, precision=hp) + b2[0]
        return jnp.transpose(out, (0, 3, 1, 2))                   # NCHW

    return (head(params["y_w1"], params["y_b1"], params["y_w2"], params["y_b2"], _silu),
            head(params["d_w1"], params["d_b1"], params["d_w2"], params["d_b2"], _gelu))


def init_params(key, cin_raw=4, c_rgb=3, ch=32, co_yolo=16, co_detr=16):
    ks = jax.random.split(key, 10)
    s = 0.1
    return {
        "pre_w": s * jax.random.normal(ks[0], (cin_raw, c_rgb), jnp.float32),
        "pre_b": s * jax.random.normal(ks[1], (1, c_rgb), jnp.float32),
        "y_w1": s * jax.random.normal(ks[2], (9, c_rgb, ch), jnp.float32),
        "y_b1": s * jax.random.normal(ks[3], (1, ch), jnp.float32),
        "y_w2": s * jax.random.normal(ks[4], (ch, co_yolo), jnp.float32),
        "y_b2": s * jax.random.normal(ks[5], (1, co_yolo), jnp.float32),
        "d_w1": s * jax.random.normal(ks[6], (9, c_rgb, ch), jnp.float32),
        "d_b1": s * jax.random.normal(ks[7], (1, ch), jnp.float32),
        "d_w2": s * jax.random.normal(ks[8], (ch, co_detr), jnp.float32),
        "d_b2": s * jax.random.normal(ks[9], (1, co_detr), jnp.float32),
    }


if __name__ == "__main__":
    key = jax.random.PRNGKey(0)
    k_x, k_p = jax.random.split(key)
    # RAW input: batch=2, 4 raw channels (RGGB planes), 16x16 spatial, NCHW.
    x = jax.random.uniform(k_x, (2, 4, 16, 16), jnp.float32)
    params = init_params(k_p)

    yolo_out, det_out = raw_pipeline_forward(x, params)
    jax.block_until_ready((yolo_out, det_out))

    assert yolo_out.shape == (2, 16, 16, 16)
    assert det_out.shape == (2, 16, 16, 16)

    # Correctness vs. the plain-JAX reference of the same synthetic modules.
    y_ref, d_ref = raw_pipeline_reference(x, params)
    assert jnp.allclose(yolo_out, y_ref, rtol=1e-3, atol=1e-3), (
        "yolo mismatch, max abs err = %e"
        % float(jnp.max(jnp.abs(yolo_out - y_ref))))
    assert jnp.allclose(det_out, d_ref, rtol=1e-3, atol=1e-3), (
        "rtdetr mismatch, max abs err = %e"
        % float(jnp.max(jnp.abs(det_out - d_ref))))

    print("KERNEL_OK")
</pallas_src>

<mosaic_0001>
module attributes {stable_mosaic.version = 11 : i64} {
  func.func @_pipeline_kernel(%arg0: i32, %arg1: memref<1x4x256xf32, #tpu.memory_space<vmem>>, %arg2: memref<8x256xf32, #tpu.memory_space<vmem>>, %arg3: memref<8x4xf32, #tpu.memory_space<vmem>>, %arg4: memref<8x1xf32, #tpu.memory_space<vmem>>, %arg5: memref<64x72xf32, #tpu.memory_space<vmem>>, %arg6: memref<64x1xf32, #tpu.memory_space<vmem>>, %arg7: memref<32x64xf32, #tpu.memory_space<vmem>>, %arg8: memref<32x1xf32, #tpu.memory_space<vmem>>, %arg9: memref<1x16x256xf32, #tpu.memory_space<vmem>>, %arg10: memref<1x16x256xf32, #tpu.memory_space<vmem>>, %arg11: memref<72x256xf32, #tpu.memory_space<vmem>>) attributes {dimension_semantics = [#tpu.dimension_semantics<parallel>], iteration_bounds = array<i64: 2>, scalar_prefetch = 0 : i64, scratch_operands = 1 : i64, tpu.core_type = #tpu.core_type<tc>, window_params = [{transform_indices = @transform_0, window_bounds = array<i64: 1, 4, 256>}, {pipeline_mode = #tpu.pipeline_mode<synchronous>, transform_indices = @transform_1, window_bounds = array<i64: 8, 256>}, {pipeline_mode = #tpu.pipeline_mode<synchronous>, transform_indices = @transform_2, window_bounds = array<i64: 8, 4>}, {pipeline_mode = #tpu.pipeline_mode<synchronous>, transform_indices = @transform_3, window_bounds = array<i64: 8, 1>}, {pipeline_mode = #tpu.pipeline_mode<synchronous>, transform_indices = @transform_4, window_bounds = array<i64: 64, 72>}, {pipeline_mode = #tpu.pipeline_mode<synchronous>, transform_indices = @transform_5, window_bounds = array<i64: 64, 1>}, {pipeline_mode = #tpu.pipeline_mode<synchronous>, transform_indices = @transform_6, window_bounds = array<i64: 32, 64>}, {pipeline_mode = #tpu.pipeline_mode<synchronous>, transform_indices = @transform_7, window_bounds = array<i64: 32, 1>}, {transform_indices = @transform_8, window_bounds = array<i64: 1, 16, 256>}, {transform_indices = @transform_9, window_bounds = array<i64: 1, 16, 256>}]} {
    %c0 = arith.constant 0 : index
    %c0_0 = arith.constant 0 : index
    %c0_1 = arith.constant 0 : index
    %0 = vector.load %arg1[%c0, %c0_0, %c0_1] : memref<1x4x256xf32, #tpu.memory_space<vmem>>, vector<1x4x256xf32>
    %1 = vector.shape_cast %0 : vector<1x4x256xf32> to vector<4x256xf32>
    %c0_2 = arith.constant 0 : index
    %c0_3 = arith.constant 0 : index
    %2 = vector.load %arg3[%c0_2, %c0_3] : memref<8x4xf32, #tpu.memory_space<vmem>>, vector<8x4xf32>
    %cst = arith.constant dense<0.000000e+00> : vector<8x256xf32>
    %3 = tpu.matmul %2, %1, %cst {dimension_numbers = #tpu.dot_dimension_numbers<[1], [0], [0], [1], [0, 0, 1, 1], [], []>} : vector<8x4xf32>, vector<4x256xf32>, vector<8x256xf32> -> vector<8x256xf32>
    %c0_4 = arith.constant 0 : index
    %c0_5 = arith.constant 0 : index
    %4 = vector.load %arg4[%c0_4, %c0_5] : memref<8x1xf32, #tpu.memory_space<vmem>>, vector<8x1xf32>
    %5 = vector.broadcast %4 : vector<8x1xf32> to vector<8x256xf32>
    %6 = arith.addf %3, %5 : vector<8x256xf32>
    %cst_6 = arith.constant 0.000000e+00 : f32
    %cst_7 = arith.constant 1.000000e+00 : f32
    %7 = vector.broadcast %cst_6 : f32 to vector<8x256xf32>
    %8 = arith.maximumf %7, %6 : vector<8x256xf32>
    %9 = vector.broadcast %cst_7 : f32 to vector<8x256xf32>
    %10 = arith.minimumf %9, %8 : vector<8x256xf32>
    %c0_8 = arith.constant 0 : index
    %c0_9 = arith.constant 0 : index
    %11 = vector.load %arg2[%c0_8, %c0_9] : memref<8x256xf32, #tpu.memory_space<vmem>>, vector<1x256xf32>
    %c1 = arith.constant 1 : index
    %c0_10 = arith.constant 0 : index
    %12 = vector.load %arg2[%c1, %c0_10] : memref<8x256xf32, #tpu.memory_space<vmem>>, vector<1x256xf32>
    %c2 = arith.constant 2 : index
    %c0_11 = arith.constant 0 : index
    %13 = vector.load %arg2[%c2, %c0_11] : memref<8x256xf32, #tpu.memory_space<vmem>>, vector<1x256xf32>
    %c3 = arith.constant 3 : index
    %c0_12 = arith.constant 0 : index
    %14 = vector.load %arg2[%c3, %c0_12] : memref<8x256xf32, #tpu.memory_space<vmem>>, vector<1x256xf32>
    %c17_i32 = arith.constant 17 : i32
    %15 = tpu.dynamic_rotate %10 by %c17_i32 dim 1 : vector<8x256xf32>, i32 -> vector<8x256xf32>
    %16 = arith.mulf %11, %13 : vector<1x256xf32>
    %17 = vector.broadcast %16 : vector<1x256xf32> to vector<8x256xf32>
    %18 = arith.mulf %15, %17 : vector<8x256xf32>
    %c0_13 = arith.constant 0 : index
    %c0_14 = arith.constant 0 : index
    %19 = vector.load %arg11[%c0_13, %c0_14] : memref<72x256xf32, #tpu.memory_space<vmem>>, vector<8x256xf32>
    tpu.vector_store %arg11[%c0_13, %c0_14], %18 {strides = array<i32>} : memref<72x256xf32, #tpu.memory_space<vmem>>, vector<8x256xf32>,
    %c16_i32 = arith.constant 16 : i32
    %20 = tpu.dynamic_rotate %10 by %c16_i32 dim 1 : vector<8x256xf32>, i32 -> vector<8x256xf32>
    %21 = vector.broadcast %11 : vector<1x256xf32> to vector<8x256xf32>
    %22 = arith.mulf %20, %21 : vector<8x256xf32>
    %c8 = arith.constant 8 : index
    %c0_15 = arith.constant 0 : index
    %23 = vector.load %arg11[%c8, %c0_15] : memref<72x256xf32, #tpu.memory_space<vmem>>, vector<8x256xf32>
    tpu.vector_store %arg11[%c8, %c0_15], %22 {strides = array<i32>} : memref<72x256xf32, #tpu.memory_space<vmem>>, vector<8x256xf32>,
    %c15_i32 = arith.constant 15 : i32
    %24 = tpu.dynamic_rotate %10 by %c15_i32 dim 1 : vector<8x256xf32>, i32 -> vector<8x256xf32>
    %25 = arith.mulf %11, %14 : vector<1x256xf32>
    %26 = vector.broadcast %25 : vector<1x256xf32> to vector<8x256xf32>
    %27 = arith.mulf %24, %26 : vector<8x256xf32>
    %c16 = arith.constant 16 : index
    %c0_16 = arith.constant 0 : index
    %28 = vector.load %arg11[%c16, %c0_16] : memref<72x256xf32, #tpu.memory_space<vmem>>, vector<8x256xf32>
    tpu.vector_store %arg11[%c16, %c0_16], %27 {strides = array<i32>} : memref<72x256xf32, #tpu.memory_space<vmem>>, vector<8x256xf32>,
    %c1_i32 = arith.constant 1 : i32
    %29 = tpu.dynamic_rotate %10 by %c1_i32 dim 1 : vector<8x256xf32>, i32 -> vector<8x256xf32>
    %30 = vector.broadcast %13 : vector<1x256xf32> to vector<8x256xf32>
    %31 = arith.mulf %29, %30 : vector<8x256xf32>
    %c24 = arith.constant 24 : index
    %c0_17 = arith.constant 0 : index
    %32 = vector.load %arg11[%c24, %c0_17] : memref<72x256xf32, #tpu.memory_space<vmem>>, vector<8x256xf32>
    tpu.vector_store %arg11[%c24, %c0_17], %31 {strides = array<i32>} : memref<72x256xf32, #tpu.memory_space<vmem>>, vector<8x256xf32>,
    %c32 = arith.constant 32 : index
    %c0_18 = arith.constant 0 : index
    %33 = vector.load %arg11[%c32, %c0_18] : memref<72x256xf32, #tpu.memory_space<vmem>>, vector<8x256xf32>
    tpu.vector_store %arg11[%c32, %c0_18], %10 {strides = array<i32>} : memref<72x256xf32, #tpu.memory_space<vmem>>, vector<8x256xf32>,
    %c255_i32 = arith.constant 255 : i32
    %34 = tpu.dynamic_rotate %10 by %c255_i32 dim 1 : vector<8x256xf32>, i32 -> vector<8x256xf32>
    %35 = vector.broadcast %14 : vector<1x256xf32> to vector<8x256xf32>
    %36 = arith.mulf %34, %35 : vector<8x256xf32>
    %c40 = arith.constant 40 : index
    %c0_19 = arith.constant 0 : index
    %37 = vector.load %arg11[%c40, %c0_19] : memref<72x256xf32, #tpu.memory_space<vmem>>, vector<8x256xf32>
    tpu.vector_store %arg11[%c40, %c0_19], %36 {strides = array<i32>} : memref<72x256xf32, #tpu.memory_space<vmem>>, vector<8x256xf32>,
    %c241_i32 = arith.constant 241 : i32
    %38 = tpu.dynamic_rotate %10 by %c241_i32 dim 1 : vector<8x256xf32>, i32 -> vector<8x256xf32>
    %39 = arith.mulf %12, %13 : vector<1x256xf32>
    %40 = vector.broadcast %39 : vector<1x256xf32> to vector<8x256xf32>
    %41 = arith.mulf %38, %40 : vector<8x256xf32>
    %c48 = arith.constant 48 : index
    %c0_20 = arith.constant 0 : index
    %42 = vector.load %arg11[%c48, %c0_20] : memref<72x256xf32, #tpu.memory_space<vmem>>, vector<8x256xf32>
    tpu.vector_store %arg11[%c48, %c0_20], %41 {strides = array<i32>} : memref<72x256xf32, #tpu.memory_space<vmem>>, vector<8x256xf32>,
    %c240_i32 = arith.constant 240 : i32
    %43 = tpu.dynamic_rotate %10 by %c240_i32 dim 1 : vector<8x256xf32>, i32 -> vector<8x256xf32>
    %44 = vector.broadcast %12 : vector<1x256xf32> to vector<8x256xf32>
    %45 = arith.mulf %43, %44 : vector<8x256xf32>
    %c56 = arith.constant 56 : index
    %c0_21 = arith.constant 0 : index
    %46 = vector.load %arg11[%c56, %c0_21] : memref<72x256xf32, #tpu.memory_space<vmem>>, vector<8x256xf32>
    tpu.vector_store %arg11[%c56, %c0_21], %45 {strides = array<i32>} : memref<72x256xf32, #tpu.memory_space<vmem>>, vector<8x256xf32>,
    %c239_i32 = arith.constant 239 : i32
    %47 = tpu.dynamic_rotate %10 by %c239_i32 dim 1 : vector<8x256xf32>, i32 -> vector<8x256xf32>
    %48 = arith.mulf %12, %14 : vector<1x256xf32>
    %49 = vector.broadcast %48 : vector<1x256xf32> to vector<8x256xf32>
    %50 = arith.mulf %47, %49 : vector<8x256xf32>
    %c64 = arith.constant 64 : index
    %c0_22 = arith.constant 0 : index
    %51 = vector.load %arg11[%c64, %c0_22] : memref<72x256xf32, #tpu.memory_space<vmem>>, vector<8x256xf32>
    tpu.vector_store %arg11[%c64, %c0_22], %50 {strides = array<i32>} : memref<72x256xf32, #tpu.memory_space<vmem>>, vector<8x256xf32>,
    %c0_23 = arith.constant 0 : index
    %c0_24 = arith.constant 0 : index
    %52 = vector.load %arg5[%c0_23, %c0_24] : memref<64x72xf32, #tpu.memory_space<vmem>>, vector<64x72xf32>
    %c0_25 = arith.constant 0 : index
    %c0_26 = arith.constant 0 : index
    %53 = vector.load %arg11[%c0_25, %c0_26] : memref<72x256xf32, #tpu.memory_space<vmem>>, vector<72x256xf32>
    %cst_27 = arith.constant dense<0.000000e+00> : vector<64x256xf32>
    %54 = tpu.matmul %52, %53, %cst_27 {dimension_numbers = #tpu.dot_dimension_numbers<[1], [0], [0], [1], [0, 0, 1, 1], [], []>} : vector<64x72xf32>, vector<72x256xf32>, vector<64x256xf32> -> vector<64x256xf32>
    %c0_28 = arith.constant 0 : index
    %c0_29 = arith.constant 0 : index
    %55 = vector.load %arg6[%c0_28, %c0_29] : memref<64x1xf32, #tpu.memory_space<vmem>>, vector<64x1xf32>
    %56 = vector.broadcast %55 : vector<64x1xf32> to vector<64x256xf32>
    %57 = arith.addf %54, %56 : vector<64x256xf32>
    %58 = vector.extract_strided_slice %57 {offsets = [0, 0], sizes = [32, 256], strides = [1, 1]} : vector<64x256xf32> to vector<32x256xf32>
    %59 = arith.negf %58 : vector<32x256xf32>
    %60 = math.exp %59 : vector<32x256xf32>
    %cst_30 = arith.constant 1.000000e+00 : f32
    %61 = vector.broadcast %cst_30 : f32 to vector<32x256xf32>
    %62 = arith.addf %61, %60 : vector<32x256xf32>
    %63 = arith.divf %61, %62 : vector<32x256xf32>
    %64 = arith.mulf %58, %63 : vector<32x256xf32>
    %65 = vector.extract_strided_slice %57 {offsets = [32, 0], sizes = [32, 256], strides = [1, 1]} : vector<64x256xf32> to vector<32x256xf32>
    %66 = arith.mulf %65, %65 : vector<32x256xf32>
    %67 = arith.mulf %65, %66 : vector<32x256xf32>
    %cst_31 = arith.constant 4.471500e-02 : f32
    %68 = vector.broadcast %cst_31 : f32 to vector<32x256xf32>
    %69 = arith.mulf %68, %67 : vector<32x256xf32>
    %70 = arith.addf %65, %69 : vector<32x256xf32>
    %cst_32 = arith.constant 0.797884583 : f32
    %71 = vector.broadcast %cst_32 : f32 to vector<32x256xf32>
    %72 = arith.mulf %71, %70 : vector<32x256xf32>
    %73 = math.tanh %72 : vector<32x256xf32>
    %cst_33 = arith.constant 1.000000e+00 : f32
    %74 = vector.broadcast %cst_33 : f32 to vector<32x256xf32>
    %75 = arith.addf %74, %73 : vector<32x256xf32>
    %cst_34 = arith.constant 5.000000e-01 : f32
    %76 = vector.broadcast %cst_34 : f32 to vector<32x256xf32>
    %77 = arith.mulf %76, %75 : vector<32x256xf32>
    %78 = arith.mulf %65, %77 : vector<32x256xf32>
    %79 = tpu.concatenate %64, %78 in 0 : vector<32x256xf32>, vector<32x256xf32> -> vector<64x256xf32>
    %c0_35 = arith.constant 0 : index
    %c0_36 = arith.constant 0 : index
    %80 = vector.load %arg7[%c0_35, %c0_36] : memref<32x64xf32, #tpu.memory_space<vmem>>, vector<32x64xf32>
    %cst_37 = arith.constant dense<0.000000e+00> : vector<32x256xf32>
    %81 = tpu.matmul %80, %79, %cst_37 {dimension_numbers = #tpu.dot_dimension_numbers<[1], [0], [0], [1], [0, 0, 1, 1], [], []>} : vector<32x64xf32>, vector<64x256xf32>, vector<32x256xf32> -> vector<32x256xf32>
    %c0_38 = arith.constant 0 : index
    %c0_39 = arith.constant 0 : index
    %82 = vector.load %arg8[%c0_38, %c0_39] : memref<32x1xf32, #tpu.memory_space<vmem>>, vector<32x1xf32>
    %83 = vector.broadcast %82 : vector<32x1xf32> to vector<32x256xf32>
    %84 = arith.addf %81, %83 : vector<32x256xf32>
    %85 = vector.extract_strided_slice %84 {offsets = [0, 0], sizes = [16, 256], strides = [1, 1]} : vector<32x256xf32> to vector<16x256xf32>
    %c0_40 = arith.constant 0 : index
    %c0_41 = arith.constant 0 : index
    %c0_42 = arith.constant 0 : index
    %86 = vector.load %arg9[%c0_40, %c0_41, %c0_42] : memref<1x16x256xf32, #tpu.memory_space<vmem>>, vector<1x16x256xf32>
    %87 = vector.shape_cast %86 : vector<1x16x256xf32> to vector<16x256xf32>
    %88 = vector.shape_cast %85 : vector<16x256xf32> to vector<1x16x256xf32>
    tpu.vector_store %arg9[%c0_40, %c0_41, %c0_42], %88 {strides = array<i32>} : memref<1x16x256xf32, #tpu.memory_space<vmem>>, vector<1x16x256xf32>,
    %89 = vector.extract_strided_slice %84 {offsets = [16, 0], sizes = [16, 256], strides = [1, 1]} : vector<32x256xf32> to vector<16x256xf32>
    %c0_43 = arith.constant 0 : index
    %c0_44 = arith.constant 0 : index
    %c0_45 = arith.constant 0 : index
    %90 = vector.load %arg10[%c0_43, %c0_44, %c0_45] : memref<1x16x256xf32, #tpu.memory_space<vmem>>, vector<1x16x256xf32>
    %91 = vector.shape_cast %90 : vector<1x16x256xf32> to vector<16x256xf32>
    %92 = vector.shape_cast %89 : vector<16x256xf32> to vector<1x16x256xf32>
    tpu.vector_store %arg10[%c0_43, %c0_44, %c0_45], %92 {strides = array<i32>} : memref<1x16x256xf32, #tpu.memory_space<vmem>>, vector<1x16x256xf32>,
    return
  }
  func.func @transform_0(%arg0: i32) -> (i32, i32, i32) {
    %c0_i32 = arith.constant 0 : i32
    %c0_i32_0 = arith.constant 0 : i32
    %c0_i32_1 = arith.constant 0 : i32
    return %arg0, %c0_i32, %c0_i32_0 : i32, i32, i32
  }
  func.func @transform_1(%arg0: i32) -> (i32, i32) {
    %c0_i32 = arith.constant 0 : i32
    %c0_i32_0 = arith.constant 0 : i32
    %c0_i32_1 = arith.constant 0 : i32
    return %c0_i32, %c0_i32_0 : i32, i32
  }
  func.func @transform_2(%arg0: i32) -> (i32, i32) {
    %c0_i32 = arith.constant 0 : i32
    %c0_i32_0 = arith.constant 0 : i32
    %c0_i32_1 = arith.constant 0 : i32
    return %c0_i32, %c0_i32_0 : i32, i32
  }
  func.func @transform_3(%arg0: i32) -> (i32, i32) {
    %c0_i32 = arith.constant 0 : i32
    %c0_i32_0 = arith.constant 0 : i32
    %c0_i32_1 = arith.constant 0 : i32
    return %c0_i32, %c0_i32_0 : i32, i32
  }
  func.func @transform_4(%arg0: i32) -> (i32, i32) {
    %c0_i32 = arith.constant 0 : i32
    %c0_i32_0 = arith.constant 0 : i32
    %c0_i32_1 = arith.constant 0 : i32
    return %c0_i32, %c0_i32_0 : i32, i32
  }
  func.func @transform_5(%arg0: i32) -> (i32, i32) {
    %c0_i32 = arith.constant 0 : i32
    %c0_i32_0 = arith.constant 0 : i32
    %c0_i32_1 = arith.constant 0 : i32
    return %c0_i32, %c0_i32_0 : i32, i32
  }
  func.func @transform_6(%arg0: i32) -> (i32, i32) {
    %c0_i32 = arith.constant 0 : i32
    %c0_i32_0 = arith.constant 0 : i32
    %c0_i32_1 = arith.constant 0 : i32
    return %c0_i32, %c0_i32_0 : i32, i32
  }
  func.func @transform_7(%arg0: i32) -> (i32, i32) {
    %c0_i32 = arith.constant 0 : i32
    %c0_i32_0 = arith.constant 0 : i32
    %c0_i32_1 = arith.constant 0 : i32
    return %c0_i32, %c0_i32_0 : i32, i32
  }
  func.func @transform_8(%arg0: i32) -> (i32, i32, i32) {
    %c0_i32 = arith.constant 0 : i32
    %c0_i32_0 = arith.constant 0 : i32
    %c0_i32_1 = arith.constant 0 : i32
    return %arg0, %c0_i32, %c0_i32_0 : i32, i32, i32
  }
  func.func @transform_9(%arg0: i32) -> (i32, i32, i32) {
    %c0_i32 = arith.constant 0 : i32
    %c0_i32_0 = arith.constant 0 : i32
    %c0_i32_1 = arith.constant 0 : i32
    return %arg0, %c0_i32, %c0_i32_0 : i32, i32, i32
  }
}

</mosaic_0001>

<llo_original>
// kernel: raw_pipeline_forward.1
$region0: #{raw_pipeline_forward.1}
  #allocation0 [shape = 'u32[]', space=smem, size = 0x4, offset = 0x4, fixed_abs, tag = 'smem constant byte address 0x4 - core index']
  #allocation1 [shape = 'u32[144,128]{1,0:T(1,128)}', space=vmem, size = 0x12000, scoped, tag = 'internal scratch']
  #allocation2 [shape = 'f32[72,256]{1,0:T(8,128)}', space=vmem, size = 0x12000, scoped, tag = 'scratch operand']
  %s0 = inlined_call_operand.vmem [shape: f32[2,4,256], index: 0, kind: input, shape index: {}]
  %s1 = inlined_call_operand.vmem [shape: f32[8,256], index: 1, kind: input, shape index: {}]
  %s2 = inlined_call_operand.vmem [shape: f32[8,4], index: 2, kind: input, shape index: {}]
  %s3 = inlined_call_operand.vmem [shape: f32[8,1], index: 3, kind: input, shape index: {}]
  %s4 = inlined_call_operand.vmem [shape: f32[64,72], index: 4, kind: input, shape index: {}]
  %s5 = inlined_call_operand.vmem [shape: f32[64,1], index: 5, kind: input, shape index: {}]
  %s6 = inlined_call_operand.vmem [shape: f32[32,64], index: 6, kind: input, shape index: {}]
  %s7 = inlined_call_operand.vmem [shape: f32[32,1], index: 7, kind: input, shape index: {}]
  %s8 = inlined_call_operand.vmem [shape: f32[2,16,256], index: 8, kind: output, shape index: {0}]
  %s9 = inlined_call_operand.vmem [shape: f32[2,16,256], index: 9, kind: output, shape index: {1}]
  %10 = xla_tuple %s8, %s9
  %s11 = sld [smem:[#allocation0]]
  $region73: #{raw_pipeline_forward.1} parent=0
    _
  %s13 = ssub.s32 1, %s11
  %s14 = scalar_select 0, %s13, %s11
  loop: start=0, step=1, limit=4
  $region2: #{raw_pipeline_forward.1} parent=0 // loop_pre_header
    _
  $region3: #{raw_pipeline_forward.1} parent=0 // loop_header
    %s16 = sphi 0, %s20
    %p17 = scmp.ge.s32.totalorder %s16, 4
    %s26 = sphi 0, %s28
    %s29 = sphi 0, %s26
    %s30 = sphi 0, %s29
    %s46 = sphi 0, %s30
    %s50 = sphi 0, %s50
    %s52 = sphi 0, %s50
    %s53 = sphi 0, %s52
    %s67 = sphi 0, %s53
    %s71 = sphi 0, %s71
    %s73 = sphi 0, %s71
    %s74 = sphi 0, %s73
    %s88 = sphi 0, %s74
    %s92 = sphi 0, %s92
    %s94 = sphi 0, %s92
    %s95 = sphi 0, %s94
    %s109 = sphi 0, %s95
    %s113 = sphi 0, %s113
    %s115 = sphi 0, %s113
    %s116 = sphi 0, %s115
    %s130 = sphi 0, %s116
    %s134 = sphi 0, %s134
    %s136 = sphi 0, %s134
    %s137 = sphi 0, %s136
    %s151 = sphi 0, %s137
    %s155 = sphi 0, %s155
    %s157 = sphi 0, %s155
    %s158 = sphi 0, %s157
    %s172 = sphi 0, %s158
    %s176 = sphi 0, %s176
    %s178 = sphi 0, %s176
    %s179 = sphi 0, %s178
    %s193 = sphi 0, %s179
    %s199 = sphi 0, %s201
    %s202 = sphi 0, %s199
    %s203 = sphi 0, %s202
    %s219 = sphi 0, %s203
    %s225 = sphi 0, %s227
    %s228 = sphi 0, %s225
    %s229 = sphi 0, %s228
    %s245 = sphi 0, %s229
  $region4: #{raw_pipeline_forward.1} parent=0 // loop_header_branch
    %19 = sbr.rel (%p17) target = $region8
  $region5: #{raw_pipeline_forward.1} parent=0 // loop_body
    %s21 = ssub.s32 %s16, 1
    %s22 = ssub.s32 %s16, 2
    %s23 = sadd.s32 %s16, 1
    %s24 = ssub.s32 %s16, %s23
    %p25 = scmp.eq.s32.totalorder %s24, 0
    %s27 = sadd.s32 %s26, 1
    %s28 = scalar_select %p25, %s26, %s27
    %p31 = pneg %p25
    %p32 = scmp.eq.s32.totalorder %s16, 1
    %p33 = por %p31, %p32
    %p34 = scmp.ne.s32.totalorder %s26, %s29
    %p35 = scmp.eq.s32.totalorder %s16, 0
    %p36 = por %p34, %p35
    %p37 = scmp.ne.s32.totalorder %s26, %s29
    %p38 = scmp.eq.s32.totalorder %s21, 1
    %p39 = por %p37, %p38
    %p40 = scmp.ne.s32.totalorder %s29, %s30
    %p41 = scmp.eq.s32.totalorder %s21, 0
    %p42 = por %p40, %p41
    %p43 = scmp.ne.s32.totalorder %s29, %s30
    %p44 = scmp.eq.s32.totalorder %s22, 1
    %p45 = por %p43, %p44
    %p47 = scmp.ne.s32.totalorder %s30, %s46
    %p48 = scmp.eq.s32.totalorder %s22, 0
    %p49 = por %p47, %p48
    %s51 = sadd.s32 %s50, 1
    %p54 = scmp.eq.s32.totalorder %s16, 1
    %p55 = scmp.ne.s32.totalorder %s50, %s52
    %p56 = scmp.eq.s32.totalorder %s16, 0
    %p57 = por %p55, %p56
    %p58 = scmp.ne.s32.totalorder %s50, %s52
    %p59 = scmp.eq.s32.totalorder %s21, 1
    %p60 = por %p58, %p59
    %p61 = scmp.ne.s32.totalorder %s52, %s53
    %p62 = scmp.eq.s32.totalorder %s21, 0
    %p63 = por %p61, %p62
    %p64 = scmp.ne.s32.totalorder %s52, %s53
    %p65 = scmp.eq.s32.totalorder %s22, 1
    %p66 = por %p64, %p65
    %p68 = scmp.ne.s32.totalorder %s53, %s67
    %p69 = scmp.eq.s32.totalorder %s22, 0
    %p70 = por %p68, %p69
    %s72 = sadd.s32 %s71, 1
    %p75 = scmp.eq.s32.totalorder %s16, 1
    %p76 = scmp.ne.s32.totalorder %s71, %s73
    %p77 = scmp.eq.s32.totalorder %s16, 0
    %p78 = por %p76, %p77
    %p79 = scmp.ne.s32.totalorder %s71, %s73
    %p80 = scmp.eq.s32.totalorder %s21, 1
    %p81 = por %p79, %p80
    %p82 = scmp.ne.s32.totalorder %s73, %s74
    %p83 = scmp.eq.s32.totalorder %s21, 0
    %p84 = por %p82, %p83
    %p85 = scmp.ne.s32.totalorder %s73, %s74
    %p86 = scmp.eq.s32.totalorder %s22, 1
    %p87 = por %p85, %p86
    %p89 = scmp.ne.s32.totalorder %s74, %s88
    %p90 = scmp.eq.s32.totalorder %s22, 0
    %p91 = por %p89, %p90
    %s93 = sadd.s32 %s92, 1
    %p96 = scmp.eq.s32.totalorder %s16, 1
    %p97 = scmp.ne.s32.totalorder %s92, %s94
    %p98 = scmp.eq.s32.totalorder %s16, 0
    %p99 = por %p97, %p98
    %p100 = scmp.ne.s32.totalorder %s92, %s94
    %p101 = scmp.eq.s32.totalorder %s21, 1
    %p102 = por %p100, %p101
    %p103 = scmp.ne.s32.totalorder %s94, %s95
    %p104 = scmp.eq.s32.totalorder %s21, 0
    %p105 = por %p103, %p104
    %p106 = scmp.ne.s32.totalorder %s94, %s95
    %p107 = scmp.eq.s32.totalorder %s22, 1
    %p108 = por %p106, %p107
    %p110 = scmp.ne.s32.totalorder %s95, %s109
    %p111 = scmp.eq.s32.totalorder %s22, 0
    %p112 = por %p110, %p111
    %s114 = sadd.s32 %s113, 1
    %p117 = scmp.eq.s32.totalorder %s16, 1
    %p118 = scmp.ne.s32.totalorder %s113, %s115
    %p119 = scmp.eq.s32.totalorder %s16, 0
    %p120 = por %p118, %p119
    %p121 = scmp.ne.s32.totalorder %s113, %s115
    %p122 = scmp.eq.s32.totalorder %s21, 1
    %p123 = por %p121, %p122
    %p124 = scmp.ne.s32.totalorder %s115, %s116
    %p125 = scmp.eq.s32.totalorder %s21, 0
    %p126 = por %p124, %p125
    %p127 = scmp.ne.s32.totalorder %s115, %s116
    %p128 = scmp.eq.s32.totalorder %s22, 1
    %p129 = por %p127, %p128
    %p131 = scmp.ne.s32.totalorder %s116, %s130
    %p132 = scmp.eq.s32.totalorder %s22, 0
    %p133 = por %p131, %p132
    %s135 = sadd.s32 %s134, 1
    %p138 = scmp.eq.s32.totalorder %s16, 1
    %p139 = scmp.ne.s32.totalorder %s134, %s136
    %p140 = scmp.eq.s32.totalorder %s16, 0
    %p141 = por %p139, %p140
    %p142 = scmp.ne.s32.totalorder %s134, %s136
    %p143 = scmp.eq.s32.totalorder %s21, 1
    %p144 = por %p142, %p143
    %p145 = scmp.ne.s32.totalorder %s136, %s137
    %p146 = scmp.eq.s32.totalorder %s21, 0
    %p147 = por %p145, %p146
    %p148 = scmp.ne.s32.totalorder %s136, %s137
    %p149 = scmp.eq.s32.totalorder %s22, 1
    %p150 = por %p148, %p149
    %p152 = scmp.ne.s32.totalorder %s137, %s151
    %p153 = scmp.eq.s32.totalorder %s22, 0
    %p154 = por %p152, %p153
    %s156 = sadd.s32 %s155, 1
    %p159 = scmp.eq.s32.totalorder %s16, 1
    %p160 = scmp.ne.s32.totalorder %s155, %s157
    %p161 = scmp.eq.s32.totalorder %s16, 0
    %p162 = por %p160, %p161
    %p163 = scmp.ne.s32.totalorder %s155, %s157
    %p164 = scmp.eq.s32.totalorder %s21, 1
    %p165 = por %p163, %p164
    %p166 = scmp.ne.s32.totalorder %s157, %s158
    %p167 = scmp.eq.s32.totalorder %s21, 0
    %p168 = por %p166, %p167
    %p169 = scmp.ne.s32.totalorder %s157, %s158
    %p170 = scmp.eq.s32.totalorder %s22, 1
    %p171 = por %p169, %p170
    %p173 = scmp.ne.s32.totalorder %s158, %s172
    %p174 = scmp.eq.s32.totalorder %s22, 0
    %p175 = por %p173, %p174
    %s177 = sadd.s32 %s176, 1
    %p180 = scmp.eq.s32.totalorder %s16, 1
    %p181 = scmp.ne.s32.totalorder %s176, %s178
    %p182 = scmp.eq.s32.totalorder %s16, 0
    %p183 = por %p181, %p182
    %p184 = scmp.ne.s32.totalorder %s176, %s178
    %p185 = scmp.eq.s32.totalorder %s21, 1
    %p186 = por %p184, %p185
    %p187 = scmp.ne.s32.totalorder %s178, %s179
    %p188 = scmp.eq.s32.totalorder %s21, 0
    %p189 = por %p187, %p188
    %p190 = scmp.ne.s32.totalorder %s178, %s179
    %p191 = scmp.eq.s32.totalorder %s22, 1
    %p192 = por %p190, %p191
    %p194 = scmp.ne.s32.totalorder %s179, %s193
    %p195 = scmp.eq.s32.totalorder %s22, 0
    %p196 = por %p194, %p195
    %s197 = ssub.s32 %s16, %s23
    %p198 = scmp.eq.s32.totalorder %s197, 0
    %s200 = sadd.s32 %s199, 1
    %s201 = scalar_select %p198, %s199, %s200
    %p204 = pneg %p198
    %p205 = scmp.eq.s32.totalorder %s16, 1
    %p206 = por %p204, %p205
    %p207 = scmp.ne.s32.totalorder %s199, %s202
    %p208 = scmp.eq.s32.totalorder %s16, 0
    %p209 = por %p207, %p208
    %p210 = scmp.ne.s32.totalorder %s199, %s202
    %p211 = scmp.eq.s32.totalorder %s21, 1
    %p212 = por %p210, %p211
    %p213 = scmp.ne.s32.totalorder %s202, %s203
    %p214 = scmp.eq.s32.totalorder %s21, 0
    %p215 = por %p213, %p214
    %p216 = scmp.ne.s32.totalorder %s202, %s203
    %p217 = scmp.eq.s32.totalorder %s22, 1
    %p218 = por %p216, %p217
    %p220 = scmp.ne.s32.totalorder %s203, %s219
    %p221 = scmp.eq.s32.totalorder %s22, 0
    %p222 = por %p220, %p221
    %s223 = ssub.s32 %s16, %s23
    %p224 = scmp.eq.s32.totalorder %s223, 0
    %s226 = sadd.s32 %s225, 1
    %s227 = scalar_select %p224, %s225, %s226
    %p230 = pneg %p224
    %p231 = scmp.eq.s32.totalorder %s16, 1
    %p232 = por %p230, %p231
    %p233 = scmp.ne.s32.totalorder %s225, %s228
    %p234 = scmp.eq.s32.totalorder %s16, 0
    %p235 = por %p233, %p234
    %p236 = scmp.ne.s32.totalorder %s225, %s228
    %p237 = scmp.eq.s32.totalorder %s21, 1
    %p238 = por %p236, %p237
    %p239 = scmp.ne.s32.totalorder %s228, %s229
    %p240 = scmp.eq.s32.totalorder %s21, 0
    %p241 = por %p239, %p240
    %p242 = scmp.ne.s32.totalorder %s228, %s229
    %p243 = scmp.eq.s32.totalorder %s22, 1
    %p244 = por %p242, %p243
    %p246 = scmp.ne.s32.totalorder %s229, %s245
    %p247 = scmp.eq.s32.totalorder %s22, 0
    %p248 = por %p246, %p247
    %p249 = scmp.le.s32.totalorder 1, %s16
    %p250 = scmp.lt.s32.totalorder %s16, 3
    %p251 = pnand %p249, %p250
    %p252 = pneg %p251
    // Predicated region
    $region9: #{raw_pipeline_forward.1} parent=5 // pred_check
      _
    $region10: #{raw_pipeline_forward.1} parent=5 // pred_check_branch
      %254 = sbr.rel (%p251) target = $region12
    $region11: #{raw_pipeline_forward.1} parent=5 // pred_region
      %s255 = ssub.s32 %s16, 1
      // Predicated region
      $region13: #{raw_pipeline_forward.1} parent=11 // pred_check
        %p256 = pneg %p63
      $region14: #{raw_pipeline_forward.1} parent=11 // pred_check_branch
        %258 = sbr.rel (%p256) target = $region16
      $region15: #{raw_pipeline_forward.1} parent=11 // pred_region
        _
      $region16: #{raw_pipeline_forward.1} parent=11 // pred_fallthru
        _
      // Predicated region
      $region17: #{raw_pipeline_forward.1} parent=11 // pred_check
        %p259 = pneg %p84
      $region18: #{raw_pipeline_forward.1} parent=11 // pred_check_branch
        %261 = sbr.rel (%p259) target = $region20
      $region19: #{raw_pipeline_forward.1} parent=11 // pred_region
        _
      $region20: #{raw_pipeline_forward.1} parent=11 // pred_fallthru
        _
      // Predicated region
      $region21: #{raw_pipeline_forward.1} parent=11 // pred_check
        %p262 = pneg %p105
      $region22: #{raw_pipeline_forward.1} parent=11 // pred_check_branch
        %264 = sbr.rel (%p262) target = $region24
      $region23: #{raw_pipeline_forward.1} parent=11 // pred_region
        _
      $region24: #{raw_pipeline_forward.1} parent=11 // pred_fallthru
        _
      // Predicated region
      $region25: #{raw_pipeline_forward.1} parent=11 // pred_check
        %p265 = pneg %p126
      $region26: #{raw_pipeline_forward.1} parent=11 // pred_check_branch
        %267 = sbr.rel (%p265) target = $region28
      $region27: #{raw_pipeline_forward.1} parent=11 // pred_region
        _
      $region28: #{raw_pipeline_forward.1} parent=11 // pred_fallthru
        _
      // Predicated region
      $region29: #{raw_pipeline_forward.1} parent=11 // pred_check
        %p268 = pneg %p147
      $region30: #{raw_pipeline_forward.1} parent=11 // pred_check_branch
        %270 = sbr.rel (%p268) target = $region32
      $region31: #{raw_pipeline_forward.1} parent=11 // pred_region
        _
      $region32: #{raw_pipeline_forward.1} parent=11 // pred_fallthru
        _
      // Predicated region
      $region33: #{raw_pipeline_forward.1} parent=11 // pred_check
        %p271 = pneg %p168
      $region34: #{raw_pipeline_forward.1} parent=11 // pred_check_branch
        %273 = sbr.rel (%p271) target = $region36
      $region35: #{raw_pipeline_forward.1} parent=11 // pred_region
        _
      $region36: #{raw_pipeline_forward.1} parent=11 // pred_fallthru
        _
      // Predicated region
      $region37: #{raw_pipeline_forward.1} parent=11 // pred_check
        %p274 = pneg %p189
      $region38: #{raw_pipeline_forward.1} parent=11 // pred_check_branch
        %276 = sbr.rel (%p274) target = $region40
      $region39: #{raw_pipeline_forward.1} parent=11 // pred_region
        _
      $region40: #{raw_pipeline_forward.1} parent=11 // pred_fallthru
        _
    $region12: #{raw_pipeline_forward.1} parent=5 // pred_fallthru
      _
    %p277 = scmp.lt.s32.totalorder %s16, 2
    // Predicated region
    $region41: #{raw_pipeline_forward.1} parent=5 // pred_check
      %p278 = pneg %p277
    $region42: #{raw_pipeline_forward.1} parent=5 // pred_check_branch
      %280 = sbr.rel (%p278) target = $region44
    $region43: #{raw_pipeline_forward.1} parent=5 // pred_region
      // Predicated region
      $region45: #{raw_pipeline_forward.1} parent=43 // pred_check
        %p281 = pneg %p36
      $region46: #{raw_pipeline_forward.1} parent=43 // pred_check_branch
        %283 = sbr.rel (%p281) target = $region48
      $region47: #{raw_pipeline_forward.1} parent=43 // pred_region
        %p284 = scmp.lt.s32.totalorder %s16, 1
        %s285 = scalar_select %p284, %s16, 1
        %s286 = smul.addr %s285, 2
        %s287 = smul.addr %s286, 4
        %s288 = scalar_lea.vmem %s0, %s287
      $region48: #{raw_pipeline_forward.1} parent=43 // pred_fallthru
        _
    $region44: #{raw_pipeline_forward.1} parent=5 // pred_fallthru
      _
    %p289 = scmp.le.s32.totalorder 1, %s16
    %p290 = scmp.lt.s32.totalorder %s16, 3
    %p291 = pnand %p289, %p290
    %p292 = pneg %p291
    // Predicated region
    $region49: #{raw_pipeline_forward.1} parent=5 // pred_check
      _
    $region50: #{raw_pipeline_forward.1} parent=5 // pred_check_branch
      %294 = sbr.rel (%p291) target = $region52
    $region51: #{raw_pipeline_forward.1} parent=5 // pred_region
      %s295 = ssub.s32 %s16, 1
      %p296 = scmp.lt.s32.totalorder %s21, 1
      %s297 = scalar_select %p296, %s21, 1
      %s298 = smul.addr %s297, 2
      %s299 = smul.addr %s298, 4
      %s300 = scalar_lea.vmem %s0, %s299
      %p301 = pneg %p42
      %p302 = pneg %p39
      %p303 = pneg %p63
      %p304 = pneg %p60
      %p305 = pneg %p84
      %p306 = pneg %p81
      %p307 = pneg %p105
      %p308 = pneg %p102
      %p309 = pneg %p126
      %p310 = pneg %p123
      %p311 = pneg %p147
      %p312 = pneg %p144
      %p313 = pneg %p168
      %p314 = pneg %p165
      %p315 = pneg %p189
      %p316 = pneg %p186
      %p317 = pneg %p215
      %p318 = pneg %p212
      %p319 = scmp.lt.s32.totalorder %s21, 1
      %s320 = scalar_select %p319, %s21, 1
      %s321 = smul.addr %s320, 4
      %s322 = smul.addr %s321, 8
      %s323 = scalar_lea.vmem %s8, %s322
      %p324 = pneg %p241
      %p325 = pneg %p238
      %p326 = scmp.lt.s32.totalorder %s21, 1
      %s327 = scalar_select %p326, %s21, 1
      %s328 = smul.addr %s327, 4
      %s329 = smul.addr %s328, 8
      %s330 = scalar_lea.vmem %s9, %s329
      %p331 = scmp.lt.s32.totalorder %s21, 1
      %s332 = scalar_select %p331, %s21, 1
      %s333 = smul.addr %s332, 2
      %s334 = smul.addr %s333, 4
      %s335 = scalar_lea.vmem %s0, %s334
      %p336 = scmp.lt.s32.totalorder %s21, 1
      %s337 = scalar_select %p336, %s21, 1
      %s338 = smul.addr %s337, 4
      %s339 = smul.addr %s338, 8
      %s340 = scalar_lea.vmem %s8, %s339
      %p341 = scmp.lt.s32.totalorder %s21, 1
      %s342 = scalar_select %p341, %s21, 1
      %s343 = smul.addr %s342, 4
      %s344 = smul.addr %s343, 8
      %s345 = scalar_lea.vmem %s9, %s344
      %v346 = vld [vmem:[%s335] sm:$0xff]
      %v347 = vld [vmem:[%s2] sm:$0xff]
      %v348 = vld [vmem:[%s3] sm:$0xff]
      %350 = vset.pattern.permute.xlu0 0
      %351 = vperm.xlu0 %350, %v348
      %v352 = vpop.permute.xlu0 %351
      %v355 = vcombine.high %v346, %v346
      %vm356 = vcmask 31744
      %v358 = vsel %vm356, %v347, 0
      %vm360 = vcmask 1043456
      %v361 = vsel %vm360, %v346, 0
      %v363 = vsel %vm360, %v355, 0
      %365 = vmatprep.subr.mxu0 %v363
      %366 = vmatpush1.msra.mxu0 %v361
      %367 = vmatprep.subr.mxu0 0.0
      %368 = vmatpush1.msra.mxu0 0.0
      %369 = vmatprep.subr.mxu0 0.0
      %370 = vmatpush1.msra.mxu0 0.0
      %371 = vmatprep.subr.mxu0 0.0
      %372 = vmatpush1.msra.mxu0 0.0
      %373 = vmatprep.subr.mxu0 0.0
      %374 = vmatpush1.msra.mxu0 0.0
      %375 = vmatprep.subr.mxu0 0.0
      %376 = vmatpush1.msra.mxu0 0.0
      %377 = vmatprep.subr.mxu0 0.0
      %378 = vmatpush1.msra.mxu0 0.0
      %379 = vmatprep.subr.mxu0 0.0
      %380 = vmatpush1.msra.mxu0 0.0
      %381 = vmatprep.subr.mxu0 0.0
      %382 = vmatpush1.msra.mxu0 0.0
      %383 = vmatprep.subr.mxu0 0.0
      %384 = vmatpush1.msra.mxu0 0.0
      %385 = vmatprep.subr.mxu0 0.0
      %386 = vmatpush1.msra.mxu0 0.0
      %387 = vmatprep.subr.mxu0 0.0
      %388 = vmatpush1.msra.mxu0 0.0
      %389 = vmatprep.subr.mxu0 0.0
      %390 = vmatpush1.msra.mxu0 0.0
      %391 = vmatprep.subr.mxu0 0.0
      %392 = vmatpush1.msra.mxu0 0.0
      %393 = vmatprep.subr.mxu0 0.0
      %394 = vmatpush1.msra.mxu0 0.0
      %395 = vmatprep.subr.mxu0 0.0
      %396 = vmatpush1.msra.mxu0 0.0
      %397 = vmatprep.subr.mxu0 0.0
      %398 = vmatpush1.msra.mxu0 0.0
      %399 = vmatprep.subr.mxu0 0.0
      %400 = vmatpush1.msra.mxu0 0.0
      %401 = vmatprep.subr.mxu0 0.0
      %402 = vmatpush1.msra.mxu0 0.0
      %403 = vmatprep.subr.mxu0 0.0
      %404 = vmatpush1.msra.mxu0 0.0
      %405 = vmatprep.subr.mxu0 0.0
      %406 = vmatpush1.msra.mxu0 0.0
      %407 = vmatprep.subr.mxu0 0.0
      %408 = vmatpush1.msra.mxu0 0.0
      %409 = vmatprep.subr.mxu0 0.0
      %410 = vmatpush1.msra.mxu0 0.0
      %411 = vmatprep.subr.mxu0 0.0
      %412 = vmatpush1.msra.mxu0 0.0
      %413 = vmatprep.subr.mxu0 0.0
      %414 = vmatpush1.msra.mxu0 0.0
      %415 = vmatprep.subr.mxu0 0.0
      %416 = vmatpush1.msra.mxu0 0.0
      %417 = vmatprep.subr.mxu0 0.0
      %418 = vmatpush1.msra.mxu0 0.0
      %419 = vmatprep.subr.mxu0 0.0
      %420 = vmatpush1.msra.mxu0 0.0
      %421 = vmatprep.subr.mxu0 0.0
      %422 = vmatpush1.msra.mxu0 0.0
      %423 = vmatprep.subr.mxu0 0.0
      %424 = vmatpush1.msra.mxu0 0.0
      %425 = vmatprep.subr.mxu0 0.0
      %426 = vmatpush1.msra.mxu0 0.0
      %427 = vmatprep.subr.mxu0 0.0
      %428 = vmatpush1.msra.mxu0 0.0
      %429 = vmatprep.mubr.f32.mxu0 0.0
      %430 = vmatmul.mubr.f32.gmra.mrb[0].mxu0 %v358
      %v431 = vpop.f32.mrb[0].mxu0
      %v432 = vadd.f32 %v352, %v431
      %v433 = vpop.f32.mrb[0].mxu0
      %v434 = vadd.f32 %v352, %v433
      %435 = vdwg.mxu0
      %v436 = vmax.f32 %v432, 0.0
      %v437 = vmax.f32 %v434, 0.0
      %v438 = vmin.f32 %v436, 1.0
      %v439 = vmin.f32 %v437, 1.0
      %v440 = vld [vmem:[%s1] ss:$8 sm:$0x3]
      %s441 = scalar_lea.vmem %s1, 1
      %v442 = vld [vmem:[%s441] ss:$8 sm:$0x3]
      %s443 = scalar_lea.vmem %s1, 2
      %v444 = vld [vmem:[%s443] ss:$8 sm:$0x3]
      %s445 = scalar_lea.vmem %s1, 3
      %v446 = vld [vmem:[%s445] ss:$8 sm:$0x3]
      %447 = vrot.lane.b32.xlu0 %v438, 17
      %v448 = vpop.permute.xlu0 %447
      %449 = vrot.lane.b32.xlu0 %v439, 17
      %v450 = vpop.permute.xlu0 %449
      %v451 = vlaneseq
      %v452 = vand.u32 %v451, 127
      %vm453 = vcmp.lt.s32.totalorder %v452, 17
      %v454 = vsel %vm453, %v448, %v450
      %v455 = vsel %vm453, %v450, %v448
      %v456 = vmul.f32 %v440, %v444
      %v458 = vlaneseq
      %v459 = vshrl.u32 %v458, 7
      %v460 = vsub.s32 0, %v459
      %v461 = vrot.slane %v456, %v460
      %v462 = vlaneseq
      %v463 = vshrl.u32 %v462, 7
      %v464 = vsub.s32 1, %v463
      %v465 = vrot.slane %v456, %v464
      %v468 = vmul.f32 %v455, %v461
      %v469 = vmul.f32 %v454, %v465
      %470 = vst [vmem:[#allocation2] sm:$0xff] %v468
      %471 = vst [vmem:[#allocation2 + $0x8] sm:$0xff] %v469
      %472 = vrot.lane.b32.xlu0 %v438, 16
      %v473 = vpop.permute.xlu0 %472
      %474 = vrot.lane.b32.xlu0 %v439, 16
      %v475 = vpop.permute.xlu0 %474
      %vm476 = vcmp.lt.s32.totalorder %v452, 16
      %v477 = vsel %vm476, %v473, %v475
      %v478 = vsel %vm476, %v475, %v473
      %v480 = vlaneseq
      %v481 = vshrl.u32 %v480, 7
      %v482 = vsub.s32 0, %v481
      %v483 = vrot.slane %v440, %v482
      %v484 = vlaneseq
      %v485 = vshrl.u32 %v484, 7
      %v486 = vsub.s32 1, %v485
      %v487 = vrot.slane %v440, %v486
      %v490 = vmul.f32 %v478, %v483
      %v491 = vmul.f32 %v477, %v487
      %492 = vst [vmem:[#allocation2 + $0x10] sm:$0xff] %v490
      %493 = vst [vmem:[#allocation2 + $0x18] sm:$0xff] %v491
      %494 = vrot.lane.b32.xlu0 %v438, 15
      %v495 = vpop.permute.xlu0 %494
      %496 = vrot.lane.b32.xlu0 %v439, 15
      %v497 = vpop.permute.xlu0 %496
      %vm498 = vcmp.lt.s32.totalorder %v452, 15
      %v499 = vsel %vm498, %v495, %v497
      %v500 = vsel %vm498, %v497, %v495
      %v501 = vmul.f32 %v440, %v446
      %v503 = vlaneseq
      %v504 = vshrl.u32 %v503, 7
      %v505 = vsub.s32 0, %v504
      %v506 = vrot.slane %v501, %v505
      %v507 = vlaneseq
      %v508 = vshrl.u32 %v507, 7
      %v509 = vsub.s32 1, %v508
      %v510 = vrot.slane %v501, %v509
      %v513 = vmul.f32 %v500, %v506
      %v514 = vmul.f32 %v499, %v510
      %515 = vst [vmem:[#allocation2 + $0x20] sm:$0xff] %v513
      %516 = vst [vmem:[#allocation2 + $0x28] sm:$0xff] %v514
      %517 = vrot.lane.b32.xlu0 %v438, 1
      %v518 = vpop.permute.xlu0 %517
      %519 = vrot.lane.b32.xlu0 %v439, 1
      %v520 = vpop.permute.xlu0 %519
      %vm521 = vcmp.lt.s32.totalorder %v452, 1
      %v522 = vsel %vm521, %v518, %v520
      %v523 = vsel %vm521, %v520, %v518
      %v525 = vlaneseq
      %v526 = vshrl.u32 %v525, 7
      %v527 = vsub.s32 0, %v526
      %v528 = vrot.slane %v444, %v527
      %v529 = vlaneseq
      %v530 = vshrl.u32 %v529, 7
      %v531 = vsub.s32 1, %v530
      %v532 = vrot.slane %v444, %v531
      %v535 = vmul.f32 %v523, %v528
      %v536 = vmul.f32 %v522, %v532
      %537 = vst [vmem:[#allocation2 + $0x30] sm:$0xff] %v535
      %538 = vst [vmem:[#allocation2 + $0x38] sm:$0xff] %v536
      %539 = vst [vmem:[#allocation2 + $0x40] sm:$0xff] %v438
      %540 = vst [vmem:[#allocation2 + $0x48] sm:$0xff] %v439
      %541 = vrot.lane.b32.xlu0 %v438, 127
      %v542 = vpop.permute.xlu0 %541
      %543 = vrot.lane.b32.xlu0 %v439, 127
      %v544 = vpop.permute.xlu0 %543
      %vm545 = vcmp.lt.s32.totalorder %v452, 127
      %v546 = vsel %vm545, %v542, %v544
      %v547 = vsel %vm545, %v544, %v542
      %v549 = vlaneseq
      %v550 = vshrl.u32 %v549, 7
      %v551 = vsub.s32 0, %v550
      %v552 = vrot.slane %v446, %v551
      %v553 = vlaneseq
      %v554 = vshrl.u32 %v553, 7
      %v555 = vsub.s32 1, %v554
      %v556 = vrot.slane %v446, %v555
      %v559 = vmul.f32 %v546, %v552
      %v560 = vmul.f32 %v547, %v556
      %561 = vst [vmem:[#allocation2 + $0x50] sm:$0xff] %v559
      %562 = vst [vmem:[#allocation2 + $0x58] sm:$0xff] %v560
      %563 = vrot.lane.b32.xlu0 %v438, 113
      %v564 = vpop.permute.xlu0 %563
      %565 = vrot.lane.b32.xlu0 %v439, 113
      %v566 = vpop.permute.xlu0 %565
      %vm567 = vcmp.lt.s32.totalorder %v452, 113
      %v568 = vsel %vm567, %v564, %v566
      %v569 = vsel %vm567, %v566, %v564
      %v570 = vmul.f32 %v442, %v444
      %v572 = vlaneseq
      %v573 = vshrl.u32 %v572, 7
      %v574 = vsub.s32 0, %v573
      %v575 = vrot.slane %v570, %v574
      %v576 = vlaneseq
      %v577 = vshrl.u32 %v576, 7
      %v578 = vsub.s32 1, %v577
      %v579 = vrot.slane %v570, %v578
      %v582 = vmul.f32 %v568, %v575
      %v583 = vmul.f32 %v569, %v579
      %584 = vst [vmem:[#allocation2 + $0x60] sm:$0xff] %v582
      %585 = vst [vmem:[#allocation2 + $0x68] sm:$0xff] %v583
      %586 = vrot.lane.b32.xlu0 %v438, 112
      %v587 = vpop.permute.xlu0 %586
      %588 = vrot.lane.b32.xlu0 %v439, 112
      %v589 = vpop.permute.xlu0 %588
      %vm590 = vcmp.lt.s32.totalorder %v452, 112
      %v591 = vsel %vm590, %v587, %v589
      %v592 = vsel %vm590, %v589, %v587
      %v594 = vlaneseq
      %v595 = vshrl.u32 %v594, 7
      %v596 = vsub.s32 0, %v595
      %v597 = vrot.slane %v442, %v596
      %v598 = vlaneseq
      %v599 = vshrl.u32 %v598, 7
      %v600 = vsub.s32 1, %v599
      %v601 = vrot.slane %v442, %v600
      %v604 = vmul.f32 %v591, %v597
      %v605 = vmul.f32 %v592, %v601
      %606 = vst [vmem:[#allocation2 + $0x70] sm:$0xff] %v604
      %607 = vst [vmem:[#allocation2 + $0x78] sm:$0xff] %v605
      %608 = vrot.lane.b32.xlu0 %v438, 111
      %v609 = vpop.permute.xlu0 %608
      %610 = vrot.lane.b32.xlu0 %v439, 111
      %v611 = vpop.permute.xlu0 %610
      %vm612 = vcmp.lt.s32.totalorder %v452, 111
      %v613 = vsel %vm612, %v609, %v611
      %v614 = vsel %vm612, %v611, %v609
      %v615 = vmul.f32 %v442, %v446
      %v617 = vlaneseq
      %v618 = vshrl.u32 %v617, 7
      %v619 = vsub.s32 0, %v618
      %v620 = vrot.slane %v615, %v619
      %v621 = vlaneseq
      %v622 = vshrl.u32 %v621, 7
      %v623 = vsub.s32 1, %v622
      %v624 = vrot.slane %v615, %v623
      %v627 = vmul.f32 %v613, %v620
      %v628 = vmul.f32 %v614, %v624
      %629 = vst [vmem:[#allocation2 + $0x80] sm:$0xff] %v627
      %630 = vst [vmem:[#allocation2 + $0x88] sm:$0xff] %v628
      %v631 = vld [vmem:[%s4] sm:$0xff]
      %v632 = vld [vmem:[%s4 + $0x8] sm:$0xff]
      %v633 = vld [vmem:[%s4 + $0x10] sm:$0xff]
      %v634 = vld [vmem:[%s4 + $0x18] sm:$0xff]
      %v635 = vld [vmem:[%s4 + $0x20] sm:$0xff]
      %v636 = vld [vmem:[%s4 + $0x28] sm:$0xff]
      %v637 = vld [vmem:[%s4 + $0x30] sm:$0xff]
      %v638 = vld [vmem:[%s4 + $0x38] sm:$0xff]
      %v639 = vld [vmem:[#allocation2] sm:$0xff]
      %v640 = vld [vmem:[#allocation2 + $0x8] sm:$0xff]
      %v641 = vld [vmem:[#allocation2 + $0x10] sm:$0xff]
      %v642 = vld [vmem:[#allocation2 + $0x18] sm:$0xff]
      %v643 = vld [vmem:[#allocation2 + $0x20] sm:$0xff]
      %v644 = vld [vmem:[#allocation2 + $0x28] sm:$0xff]
      %v645 = vld [vmem:[#allocation2 + $0x30] sm:$0xff]
      %v646 = vld [vmem:[#allocation2 + $0x38] sm:$0xff]
      %v647 = vld [vmem:[#allocation2 + $0x40] sm:$0xff]
      %v648 = vld [vmem:[#allocation2 + $0x48] sm:$0xff]
      %v649 = vld [vmem:[#allocation2 + $0x50] sm:$0xff]
      %v650 = vld [vmem:[#allocation2 + $0x58] sm:$0xff]
      %v651 = vld [vmem:[#allocation2 + $0x60] sm:$0xff]
      %v652 = vld [vmem:[#allocation2 + $0x68] sm:$0xff]
      %v653 = vld [vmem:[#allocation2 + $0x70] sm:$0xff]
      %v654 = vld [vmem:[#allocation2 + $0x78] sm:$0xff]
      %v655 = vld [vmem:[#allocation2 + $0x80] sm:$0xff]
      %v656 = vld [vmem:[#allocation2 + $0x88] sm:$0xff]
      %v657 = vld [vmem:[%s5] sm:$0xff]
      %v658 = vld [vmem:[%s5 + $0x8] sm:$0xff]
      %v659 = vld [vmem:[%s5 + $0x10] sm:$0xff]
      %v660 = vld [vmem:[%s5 + $0x18] sm:$0xff]
      %v661 = vld [vmem:[%s5 + $0x20] sm:$0xff]
      %v662 = vld [vmem:[%s5 + $0x28] sm:$0xff]
      %v663 = vld [vmem:[%s5 + $0x30] sm:$0xff]
      %v664 = vld [vmem:[%s5 + $0x38] sm:$0xff]
      %666 = vset.pattern.permute.xlu0 0
      %667 = vperm.xlu0 %666, %v657
      %v668 = vpop.permute.xlu0 %667
      %671 = vset.pattern.permute.xlu0 0
      %672 = vperm.xlu0 %671, %v658
      %v673 = vpop.permute.xlu0 %672
      %676 = vset.pattern.permute.xlu0 0
      %677 = vperm.xlu0 %676, %v659
      %v678 = vpop.permute.xlu0 %677
      %681 = vset.pattern.permute.xlu0 0
      %682 = vperm.xlu0 %681, %v660
      %v683 = vpop.permute.xlu0 %682
      %686 = vset.pattern.permute.xlu0 0
      %687 = vperm.xlu0 %686, %v661
      %v688 = vpop.permute.xlu0 %687
      %691 = vset.pattern.permute.xlu0 0
      %692 = vperm.xlu0 %691, %v662
      %v693 = vpop.permute.xlu0 %692
      %696 = vset.pattern.permute.xlu0 0
      %697 = vperm.xlu0 %696, %v663
      %v698 = vpop.permute.xlu0 %697
      %701 = vset.pattern.permute.xlu0 0
      %702 = vperm.xlu0 %701, %v664
      %v703 = vpop.permute.xlu0 %702
      %vm705 = vcmask 588800
      %v707 = vsel %vm705, %v631, 0
      %v710 = vsel %vm705, %v632, 0
      %v713 = vsel %vm705, %v633, 0
      %v716 = vsel %vm705, %v634, 0
      %v719 = vsel %vm705, %v635, 0
      %v722 = vsel %vm705, %v636, 0
      %v725 = vsel %vm705, %v637, 0
      %v728 = vsel %vm705, %v638, 0
      %730 = vmatprep.subr.mxu0 %v640
      %731 = vmatpush1.msra.mxu0 %v639
      %732 = vmatprep.subr.mxu0 %v642
      %733 = vmatpush1.msra.mxu0 %v641
      %734 = vmatprep.subr.mxu0 %v644
      %735 = vmatpush1.msra.mxu0 %v643
      %736 = vmatprep.subr.mxu0 %v646
      %737 = vmatpush1.msra.mxu0 %v645
      %738 = vmatprep.subr.mxu0 %v648
      %739 = vmatpush1.msra.mxu0 %v647
      %740 = vmatprep.subr.mxu0 %v650
      %741 = vmatpush1.msra.mxu0 %v649
      %742 = vmatprep.subr.mxu0 %v652
      %743 = vmatpush1.msra.mxu0 %v651
      %744 = vmatprep.subr.mxu0 %v654
      %745 = vmatpush1.msra.mxu0 %v653
      %746 = vmatprep.subr.mxu0 %v656
      %747 = vmatpush1.msra.mxu0 %v655
      %748 = vmatprep.subr.mxu0 0.0
      %749 = vmatpush1.msra.mxu0 0.0
      %750 = vmatprep.subr.mxu0 0.0
      %751 = vmatpush1.msra.mxu0 0.0
      %752 = vmatprep.subr.mxu0 0.0
      %753 = vmatpush1.msra.mxu0 0.0
      %754 = vmatprep.subr.mxu0 0.0
      %755 = vmatpush1.msra.mxu0 0.0
      %756 = vmatprep.subr.mxu0 0.0
      %757 = vmatpush1.msra.mxu0 0.0
      %758 = vmatprep.subr.mxu0 0.0
      %759 = vmatpush1.msra.mxu0 0.0
      %760 = vmatprep.subr.mxu0 0.0
      %761 = vmatpush1.msra.mxu0 0.0
      %762 = vmatprep.subr.mxu0 0.0
      %763 = vmatpush1.msra.mxu0 0.0
      %764 = vmatprep.subr.mxu0 0.0
      %765 = vmatpush1.msra.mxu0 0.0
      %766 = vmatprep.subr.mxu0 0.0
      %767 = vmatpush1.msra.mxu0 0.0
      %768 = vmatprep.subr.mxu0 0.0
      %769 = vmatpush1.msra.mxu0 0.0
      %770 = vmatprep.subr.mxu0 0.0
      %771 = vmatpush1.msra.mxu0 0.0
      %772 = vmatprep.subr.mxu0 0.0
      %773 = vmatpush1.msra.mxu0 0.0
      %774 = vmatprep.subr.mxu0 0.0
      %775 = vmatpush1.msra.mxu0 0.0
      %776 = vmatprep.subr.mxu0 0.0
      %777 = vmatpush1.msra.mxu0 0.0
      %778 = vmatprep.subr.mxu0 0.0
      %779 = vmatpush1.msra.mxu0 0.0
      %780 = vmatprep.subr.mxu0 0.0
      %781 = vmatpush1.msra.mxu0 0.0
      %782 = vmatprep.subr.mxu0 0.0
      %783 = vmatpush1.msra.mxu0 0.0
      %784 = vmatprep.subr.mxu0 0.0
      %785 = vmatpush1.msra.mxu0 0.0
      %786 = vmatprep.subr.mxu0 0.0
      %787 = vmatpush1.msra.mxu0 0.0
      %788 = vmatprep.subr.mxu0 0.0
      %789 = vmatpush1.msra.mxu0 0.0
      %790 = vmatprep.subr.mxu0 0.0
      %791 = vmatpush1.msra.mxu0 0.0
      %792 = vmatprep.subr.mxu0 0.0
      %793 = vmatpush1.msra.mxu0 0.0
      %794 = vmatprep.mubr.f32.mxu0 0.0
      %795 = vmatmul.mubr.f32.gmra.mrb[0].mxu0 %v707
      %v796 = vpop.f32.mrb[0].mxu0
      %v797 = vadd.f32 %v668, %v796
      %v798 = vpop.f32.mrb[0].mxu0
      %v799 = vadd.f32 %v668, %v798
      %800 = vmatprep.mubr.f32.mxu0 0.0
      %801 = vmatmul.mubr.f32.gmra.mrb[0].mxu0 %v710
      %v802 = vpop.f32.mrb[0].mxu0
      %v803 = vadd.f32 %v673, %v802
      %v804 = vpop.f32.mrb[0].mxu0
      %v805 = vadd.f32 %v673, %v804
      %806 = vmatprep.mubr.f32.mxu0 0.0
      %807 = vmatmul.mubr.f32.gmra.mrb[0].mxu0 %v713
      %v808 = vpop.f32.mrb[0].mxu0
      %v809 = vadd.f32 %v678, %v808
      %v810 = vpop.f32.mrb[0].mxu0
      %v811 = vadd.f32 %v678, %v810
      %812 = vmatprep.mubr.f32.mxu0 0.0
      %813 = vmatmul.mubr.f32.gmra.mrb[0].mxu0 %v716
      %v814 = vpop.f32.mrb[0].mxu0
      %v815 = vadd.f32 %v683, %v814
      %v816 = vpop.f32.mrb[0].mxu0
      %v817 = vadd.f32 %v683, %v816
      %818 = vmatprep.mubr.f32.mxu0 0.0
      %819 = vmatmul.mubr.f32.gmra.mrb[0].mxu0 %v719
      %v820 = vpop.f32.mrb[0].mxu0
      %v821 = vadd.f32 %v688, %v820
      %v822 = vpop.f32.mrb[0].mxu0
      %v823 = vadd.f32 %v688, %v822
      %824 = vmatprep.mubr.f32.mxu0 0.0
      %825 = vmatmul.mubr.f32.gmra.mrb[0].mxu0 %v722
      %v826 = vpop.f32.mrb[0].mxu0
      %v827 = vadd.f32 %v693, %v826
      %v828 = vpop.f32.mrb[0].mxu0
      %v829 = vadd.f32 %v693, %v828
      %830 = vmatprep.mubr.f32.mxu0 0.0
      %831 = vmatmul.mubr.f32.gmra.mrb[0].mxu0 %v725
      %v832 = vpop.f32.mrb[0].mxu0
      %v833 = vadd.f32 %v698, %v832
      %v834 = vpop.f32.mrb[0].mxu0
      %v835 = vadd.f32 %v698, %v834
      %836 = vmatprep.mubr.f32.mxu0 0.0
      %837 = vmatmul.mubr.f32.gmra.mrb[0].mxu0 %v728
      %v838 = vpop.f32.mrb[0].mxu0
      %v839 = vadd.f32 %v703, %v838
      %v840 = vpop.f32.mrb[0].mxu0
      %v841 = vadd.f32 %v703, %v840
      %842 = vdwg.mxu0
      %v843 = vxor.u32 %v797, 2147483648
      %v844 = vxor.u32 %v799, 2147483648
      %v845 = vxor.u32 %v803, 2147483648
      %v846 = vxor.u32 %v805, 2147483648
      %v847 = vxor.u32 %v809, 2147483648
      %v848 = vxor.u32 %v811, 2147483648
      %v849 = vxor.u32 %v815, 2147483648
      %v850 = vxor.u32 %v817, 2147483648
      %v851 = vmul.f32 %v843, 1.442695
      %v852 = vpow.pop %v851
      %v853 = vmul.f32 %v844, 1.442695
      %v854 = vpow.pop %v853
      %v855 = vmul.f32 %v845, 1.442695
      %v856 = vpow.pop %v855
      %v857 = vmul.f32 %v846, 1.442695
      %v858 = vpow.pop %v857
      %v859 = vmul.f32 %v847, 1.442695
      %v860 = vpow.pop %v859
      %v861 = vmul.f32 %v848, 1.442695
      %v862 = vpow.pop %v861
      %v863 = vmul.f32 %v849, 1.442695
      %v864 = vpow.pop %v863
      %v865 = vmul.f32 %v850, 1.442695
      %v866 = vpow.pop %v865
      %v867 = vadd.f32 %v852, 1.0
      %v868 = vadd.f32 %v854, 1.0
      %v869 = vadd.f32 %v856, 1.0
      %v870 = vadd.f32 %v858, 1.0
      %v871 = vadd.f32 %v860, 1.0
      %v872 = vadd.f32 %v862, 1.0
      %v873 = vadd.f32 %v864, 1.0
      %v874 = vadd.f32 %v866, 1.0
      %v875 = vrcp.pop %v867
      %v876 = vmul.f32 1.0, %v875
      %v877 = vrcp.pop %v868
      %v878 = vmul.f32 1.0, %v877
      %v879 = vrcp.pop %v869
      %v880 = vmul.f32 1.0, %v879
      %v881 = vrcp.pop %v870
      %v882 = vmul.f32 1.0, %v881
      %v883 = vrcp.pop %v871
      %v884 = vmul.f32 1.0, %v883
      %v885 = vrcp.pop %v872
      %v886 = vmul.f32 1.0, %v885
      %v887 = vrcp.pop %v873
      %v888 = vmul.f32 1.0, %v887
      %v889 = vrcp.pop %v874
      %v890 = vmul.f32 1.0, %v889
      %v891 = vmul.f32 %v797, %v876
      %v892 = vmul.f32 %v799, %v878
      %v893 = vmul.f32 %v803, %v880
      %v894 = vmul.f32 %v805, %v882
      %v895 = vmul.f32 %v809, %v884
      %v896 = vmul.f32 %v811, %v886
      %v897 = vmul.f32 %v815, %v888
      %v898 = vmul.f32 %v817, %v890
      %v899 = vmul.f32 %v821, %v821
      %v900 = vmul.f32 %v823, %v823
      %v901 = vmul.f32 %v827, %v827
      %v902 = vmul.f32 %v829, %v829
      %v903 = vmul.f32 %v833, %v833
      %v904 = vmul.f32 %v835, %v835
      %v905 = vmul.f32 %v839, %v839
      %v906 = vmul.f32 %v841, %v841
      %v907 = vmul.f32 %v821, %v899
      %v908 = vmul.f32 %v823, %v900
      %v909 = vmul.f32 %v827, %v901
      %v910 = vmul.f32 %v829, %v902
      %v911 = vmul.f32 %v833, %v903
      %v912 = vmul.f32 %v835, %v904
      %v913 = vmul.f32 %v839, %v905
      %v914 = vmul.f32 %v841, %v906
      %v915 = vmul.f32 %v907, 0.044715
      %v916 = vmul.f32 %v908, 0.044715
      %v917 = vmul.f32 %v909, 0.044715
      %v918 = vmul.f32 %v910, 0.044715
      %v919 = vmul.f32 %v911, 0.044715
      %v920 = vmul.f32 %v912, 0.044715
      %v921 = vmul.f32 %v913, 0.044715
      %v922 = vmul.f32 %v914, 0.044715
      %v923 = vadd.f32 %v821, %v915
      %v924 = vadd.f32 %v823, %v916
      %v925 = vadd.f32 %v827, %v917
      %v926 = vadd.f32 %v829, %v918
      %v927 = vadd.f32 %v833, %v919
      %v928 = vadd.f32 %v835, %v920
      %v929 = vadd.f32 %v839, %v921
      %v930 = vadd.f32 %v841, %v922
      %v931 = vmul.f32 %v923, 0.7978846
      %v932 = vmul.f32 %v924, 0.7978846
      %v933 = vmul.f32 %v925, 0.7978846
      %v934 = vmul.f32 %v926, 0.7978846
      %v935 = vmul.f32 %v927, 0.7978846
      %v936 = vmul.f32 %v928, 0.7978846
      %v937 = vmul.f32 %v929, 0.7978846
      %v938 = vmul.f32 %v930, 0.7978846
      %v939 = vtanh.pop %v931
      %v940 = vtanh.pop %v932
      %v941 = vtanh.pop %v933
      %v942 = vtanh.pop %v934
      %v943 = vtanh.pop %v935
      %v944 = vtanh.pop %v936
      %v945 = vtanh.pop %v937
      %v946 = vtanh.pop %v938
      %v947 = vadd.f32 %v939, 1.0
      %v948 = vadd.f32 %v940, 1.0
      %v949 = vadd.f32 %v941, 1.0
      %v950 = vadd.f32 %v942, 1.0
      %v951 = vadd.f32 %v943, 1.0
      %v952 = vadd.f32 %v944, 1.0
      %v953 = vadd.f32 %v945, 1.0
      %v954 = vadd.f32 %v946, 1.0
      %v955 = vmul.f32 %v947, 0.5
      %v956 = vmul.f32 %v948, 0.5
      %v957 = vmul.f32 %v949, 0.5
      %v958 = vmul.f32 %v950, 0.5
      %v959 = vmul.f32 %v951, 0.5
      %v960 = vmul.f32 %v952, 0.5
      %v961 = vmul.f32 %v953, 0.5
      %v962 = vmul.f32 %v954, 0.5
      %v963 = vmul.f32 %v821, %v955
      %v964 = vmul.f32 %v823, %v956
      %v965 = vmul.f32 %v827, %v957
      %v966 = vmul.f32 %v829, %v958
      %v967 = vmul.f32 %v833, %v959
      %v968 = vmul.f32 %v835, %v960
      %v969 = vmul.f32 %v839, %v961
      %v970 = vmul.f32 %v841, %v962
      %v971 = vld [vmem:[%s6] sm:$0xff]
      %v972 = vld [vmem:[%s6 + $0x8] sm:$0xff]
      %v973 = vld [vmem:[%s6 + $0x10] sm:$0xff]
      %v974 = vld [vmem:[%s6 + $0x18] sm:$0xff]
      %v975 = vld [vmem:[%s7] sm:$0xff]
      %v976 = vld [vmem:[%s7 + $0x8] sm:$0xff]
      %v977 = vld [vmem:[%s7 + $0x10] sm:$0xff]
      %v978 = vld [vmem:[%s7 + $0x18] sm:$0xff]
      %980 = vset.pattern.permute.xlu0 0
      %981 = vperm.xlu0 %980, %v975
      %v982 = vpop.permute.xlu0 %981
      %985 = vset.pattern.permute.xlu0 0
      %986 = vperm.xlu0 %985, %v976
      %v987 = vpop.permute.xlu0 %986
      %990 = vset.pattern.permute.xlu0 0
      %991 = vperm.xlu0 %990, %v977
      %v992 = vpop.permute.xlu0 %991
      %995 = vset.pattern.permute.xlu0 0
      %996 = vperm.xlu0 %995, %v978
      %v997 = vpop.permute.xlu0 %996
      %vm999 = vcmask 523264
      %v1001 = vsel %vm999, %v971, 0
      %v1004 = vsel %vm999, %v972, 0
      %v1007 = vsel %vm999, %v973, 0
      %v1010 = vsel %vm999, %v974, 0
      %1012 = vmatprep.subr.mxu0 %v892
      %1013 = vmatpush1.msra.mxu0 %v891
      %1014 = vmatprep.subr.mxu0 %v894
      %1015 = vmatpush1.msra.mxu0 %v893
      %1016 = vmatprep.subr.mxu0 %v896
      %1017 = vmatpush1.msra.mxu0 %v895
      %1018 = vmatprep.subr.mxu0 %v898
      %1019 = vmatpush1.msra.mxu0 %v897
      %1020 = vmatprep.subr.mxu0 %v964
      %1021 = vmatpush1.msra.mxu0 %v963
      %1022 = vmatprep.subr.mxu0 %v966
      %1023 = vmatpush1.msra.mxu0 %v965
      %1024 = vmatprep.subr.mxu0 %v968
      %1025 = vmatpush1.msra.mxu0 %v967
      %1026 = vmatprep.subr.mxu0 %v970
      %1027 = vmatpush1.msra.mxu0 %v969
      %1028 = vmatprep.subr.mxu0 0.0
      %1029 = vmatpush1.msra.mxu0 0.0
      %1030 = vmatprep.subr.mxu0 0.0
      %1031 = vmatpush1.msra.mxu0 0.0
      %1032 = vmatprep.subr.mxu0 0.0
      %1033 = vmatpush1.msra.mxu0 0.0
      %1034 = vmatprep.subr.mxu0 0.0
      %1035 = vmatpush1.msra.mxu0 0.0
      %1036 = vmatprep.subr.mxu0 0.0
      %1037 = vmatpush1.msra.mxu0 0.0
      %1038 = vmatprep.subr.mxu0 0.0
      %1039 = vmatpush1.msra.mxu0 0.0
      %1040 = vmatprep.subr.mxu0 0.0
      %1041 = vmatpush1.msra.mxu0 0.0
      %1042 = vmatprep.subr.mxu0 0.0
      %1043 = vmatpush1.msra.mxu0 0.0
      %1044 = vmatprep.subr.mxu0 0.0
      %1045 = vmatpush1.msra.mxu0 0.0
      %1046 = vmatprep.subr.mxu0 0.0
      %1047 = vmatpush1.msra.mxu0 0.0
      %1048 = vmatprep.subr.mxu0 0.0
      %1049 = vmatpush1.msra.mxu0 0.0
      %1050 = vmatprep.subr.mxu0 0.0
      %1051 = vmatpush1.msra.mxu0 0.0
      %1052 = vmatprep.subr.mxu0 0.0
      %1053 = vmatpush1.msra.mxu0 0.0
      %1054 = vmatprep.subr.mxu0 0.0
      %1055 = vmatpush1.msra.mxu0 0.0
      %1056 = vmatprep.subr.mxu0 0.0
      %1057 = vmatpush1.msra.mxu0 0.0
      %1058 = vmatprep.subr.mxu0 0.0
      %1059 = vmatpush1.msra.mxu0 0.0
      %1060 = vmatprep.subr.mxu0 0.0
      %1061 = vmatpush1.msra.mxu0 0.0
      %1062 = vmatprep.subr.mxu0 0.0
      %1063 = vmatpush1.msra.mxu0 0.0
      %1064 = vmatprep.subr.mxu0 0.0
      %1065 = vmatpush1.msra.mxu0 0.0
      %1066 = vmatprep.subr.mxu0 0.0
      %1067 = vmatpush1.msra.mxu0 0.0
      %1068 = vmatprep.subr.mxu0 0.0
      %1069 = vmatpush1.msra.mxu0 0.0
      %1070 = vmatprep.subr.mxu0 0.0
      %1071 = vmatpush1.msra.mxu0 0.0
      %1072 = vmatprep.subr.mxu0 0.0
      %1073 = vmatpush1.msra.mxu0 0.0
      %1074 = vmatprep.subr.mxu0 0.0
      %1075 = vmatpush1.msra.mxu0 0.0
      %1076 = vmatprep.mubr.f32.mxu0 0.0
      %1077 = vmatmul.mubr.f32.gmra.mrb[0].mxu0 %v1001
      %v1078 = vpop.f32.mrb[0].mxu0
      %v1079 = vadd.f32 %v982, %v1078
      %v1080 = vpop.f32.mrb[0].mxu0
      %v1081 = vadd.f32 %v982, %v1080
      %1082 = vmatprep.mubr.f32.mxu0 0.0
      %1083 = vmatmul.mubr.f32.gmra.mrb[0].mxu0 %v1004
      %v1084 = vpop.f32.mrb[0].mxu0
      %v1085 = vadd.f32 %v987, %v1084
      %v1086 = vpop.f32.mrb[0].mxu0
      %v1087 = vadd.f32 %v987, %v1086
      %1088 = vmatprep.mubr.f32.mxu0 0.0
      %1089 = vmatmul.mubr.f32.gmra.mrb[0].mxu0 %v1007
      %v1090 = vpop.f32.mrb[0].mxu0
      %v1091 = vadd.f32 %v992, %v1090
      %v1092 = vpop.f32.mrb[0].mxu0
      %v1093 = vadd.f32 %v992, %v1092
      %1094 = vmatprep.mubr.f32.mxu0 0.0
      %1095 = vmatmul.mubr.f32.gmra.mrb[0].mxu0 %v1010
      %v1096 = vpop.f32.mrb[0].mxu0
      %v1097 = vadd.f32 %v997, %v1096
      %v1098 = vpop.f32.mrb[0].mxu0
      %v1099 = vadd.f32 %v997, %v1098
      %1100 = vdwg.mxu0
      %1101 = vst [vmem:[%s340] sm:$0xff] %v1079
      %1102 = vst [vmem:[%s340 + $0x8] sm:$0xff] %v1081
      %1103 = vst [vmem:[%s340 + $0x10] sm:$0xff] %v1085
      %1104 = vst [vmem:[%s340 + $0x18] sm:$0xff] %v1087
      %1105 = vst [vmem:[%s345] sm:$0xff] %v1091
      %1106 = vst [vmem:[%s345 + $0x8] sm:$0xff] %v1093
      %1107 = vst [vmem:[%s345 + $0x10] sm:$0xff] %v1097
      %1108 = vst [vmem:[%s345 + $0x18] sm:$0xff] %v1099
      %p1109 = scmp.lt.s32.totalorder %s21, 1
      %s1110 = scalar_select %p1109, %s21, 1
      %s1111 = smul.addr %s1110, 4
      %s1112 = smul.addr %s1111, 8
      %s1113 = scalar_lea.vmem %s8, %s1112
      %p1114 = scmp.lt.s32.totalorder %s21, 1
      %s1115 = scalar_select %p1114, %s21, 1
      %s1116 = smul.addr %s1115, 4
      %s1117 = smul.addr %s1116, 8
      %s1118 = scalar_lea.vmem %s9, %s1117
      // Predicated region
      $region53: #{raw_pipeline_forward.1} parent=51 // pred_check
        %p1119 = pneg %p212
      $region54: #{raw_pipeline_forward.1} parent=51 // pred_check_branch
        %1121 = sbr.rel (%p1119) target = $region56
      $region55: #{raw_pipeline_forward.1} parent=51 // pred_region
        _
      $region56: #{raw_pipeline_forward.1} parent=51 // pred_fallthru
        _
      // Predicated region
      $region57: #{raw_pipeline_forward.1} parent=51 // pred_check
        %p1122 = pneg %p238
      $region58: #{raw_pipeline_forward.1} parent=51 // pred_check_branch
        %1124 = sbr.rel (%p1122) target = $region60
      $region59: #{raw_pipeline_forward.1} parent=51 // pred_region
        _
      $region60: #{raw_pipeline_forward.1} parent=51 // pred_fallthru
        _
    $region52: #{raw_pipeline_forward.1} parent=5 // pred_fallthru
      _
    %p1125 = scmp.le.s32.totalorder 2, %s16
    // Predicated region
    $region61: #{raw_pipeline_forward.1} parent=5 // pred_check
      %p1126 = pneg %p1125
    $region62: #{raw_pipeline_forward.1} parent=5 // pred_check_branch
      %1128 = sbr.rel (%p1126) target = $region64
    $region63: #{raw_pipeline_forward.1} parent=5 // pred_region
      %s1129 = ssub.s32 %s16, 2
      // Predicated region
      $region65: #{raw_pipeline_forward.1} parent=63 // pred_check
        %p1130 = pneg %p218
      $region66: #{raw_pipeline_forward.1} parent=63 // pred_check_branch
        %1132 = sbr.rel (%p1130) target = $region68
      $region67: #{raw_pipeline_forward.1} parent=63 // pred_region
        %p1133 = scmp.lt.s32.totalorder %s22, 1
        %s1134 = scalar_select %p1133, %s22, 1
        %s1135 = smul.addr %s1134, 4
        %s1136 = smul.addr %s1135, 8
        %s1137 = scalar_lea.vmem %s8, %s1136
      $region68: #{raw_pipeline_forward.1} parent=63 // pred_fallthru
        _
      // Predicated region
      $region69: #{raw_pipeline_forward.1} parent=63 // pred_check
        %p1138 = pneg %p244
      $region70: #{raw_pipeline_forward.1} parent=63 // pred_check_branch
        %1140 = sbr.rel (%p1138) target = $region72
      $region71: #{raw_pipeline_forward.1} parent=63 // pred_region
        %p1141 = scmp.lt.s32.totalorder %s22, 1
        %s1142 = scalar_select %p1141, %s22, 1
        %s1143 = smul.addr %s1142, 4
        %s1144 = smul.addr %s1143, 8
        %s1145 = scalar_lea.vmem %s9, %s1144
      $region72: #{raw_pipeline_forward.1} parent=63 // pred_fallthru
        _
    $region64: #{raw_pipeline_forward.1} parent=5 // pred_fallthru
      _
  $region6: #{raw_pipeline_forward.1} parent=0 // loop_footer
    %s20 = sadd.s32 1, %s16
  $region7: #{raw_pipeline_forward.1} parent=0 // loop_footer_branch
    %15 = sbr.rel target = $region3
  $region8: #{raw_pipeline_forward.1} parent=0 // loop_exit
    _

</llo_original>
